<compile_context>
chip_gen: v7x
topology: tpu7x:2x2x1
jax: 0.10.0
libtpu: 0.0.40
codegen_flags: <defaults>
</compile_context>

<pallas_src>
import functools
import math

import jax
import jax.numpy as jnp
from jax import lax
from jax.experimental import pallas as pl
from jax.experimental.pallas import tpu as pltpu


def _tpu_vmem_capacity_bytes() -> int:
    """Physical VMEM of the local TPU generation (fallback: 64 MiB, v7x-safe)."""
    try:
        cap = getattr(pltpu.get_tpu_info(), "vmem_capacity_bytes", None)
        if cap:
            return int(cap)
    except Exception:
        pass
    return 64 * 1024 * 1024


def _pick_q_tile(s_pad, c, itemsize, vmem_cap, max_tile=None):
    """Largest 128-multiple seq tile whose kernel-2 working set fits in VMEM."""
    budget = int(vmem_cap * 0.6)  # headroom for Mosaic scratch, misc temporaries
    cands = [t for t in (512, 256, 128) if max_tile is None or t <= max_tile] or [128]
    for tq in cands:
        if s_pad % tq:
            continue
        kv_resident = 2 * 2 * c * s_pad * itemsize  # K + V (double-buffered)
        scores = 2 * tq * s_pad * 4                 # fp32 scores + probabilities
        tiles = 8 * c * tq * itemsize               # x/out tiles (dbl-buffered) + q temps
        if kv_resident + scores + tiles <= budget:
            return tq
    return 128


def _kv_proj_kernel(x_ref, wkv_ref, bkv_ref, k_ref, v_ref):
    """Per (batch, seq-tile): one stacked MXU pass [K;V] = W_kv @ x_tile + b_kv.

    x_ref: (C, TS) channel-major input tile.  Outputs K channel-major (C, TS) and
    V row-major (TS, C) so both big matmuls of the attention kernel stay in
    canonical (M,K)@(K,N) MXU orientation.
    """
    c = k_ref.shape[0]
    kv = jnp.dot(wkv_ref[...], x_ref[...],
                 preferred_element_type=jnp.float32) + bkv_ref[...]      # (2C, TS)
    k_ref[...] = kv[:c, :].astype(k_ref.dtype)                           # (C, TS)
    # Small (C, TS) -> (TS, C) tile transpose; row slice at C is sublane-aligned.
    v_ref[...] = jnp.transpose(kv[c:, :]).astype(v_ref.dtype)            # (TS, C)


def _attn_kernel(x_ref, k_ref, v_ref, wq_ref, wot_ref, bq_ref, bo_ref, o_ref,
                 *, seq_len, seq_pad):
    """Per (batch, q-tile): Q proj -> softmax(Q K^T) V -> out_proj -> + residual.

    x_ref: (C, TQ) input/residual tile (Q projected here -> no Q HBM round trip),
    k_ref: (C, S_pad) resident K^T, v_ref: (S_pad, C) resident V,
    wq_ref: (C, C) scale-folded W_q, wot_ref: (C, C) = W_out^T, o_ref: (C, TQ).
    """
    x_cm = x_ref[...]                                                    # (C, TQ)

    # Fused, scale-folded Q projection (canonical), then the single small relayout
    # to (TQ, C) so the big score matmul below is in canonical orientation.
    q_cm = jnp.dot(wq_ref[...], x_cm,
                   preferred_element_type=jnp.float32) + bq_ref[...]     # (C, TQ)
    q_rm = jnp.transpose(q_cm).astype(k_ref.dtype)                       # (TQ, C)

    # scores[i, j] = sum_c q[i, c] * kT[c, j]  -- canonical (TQ,C)@(C,S) on the MXU.
    s = jnp.dot(q_rm, k_ref[...], preferred_element_type=jnp.float32)    # (TQ, S_pad)
    if seq_pad != seq_len:  # static branch: mask padded keys
        key_idx = lax.broadcasted_iota(jnp.int32, (1, seq_pad), 1)
        s = s + jnp.where(key_idx < seq_len, 0.0, -1e30).astype(jnp.float32)

    # Numerically-stable softmax; stats in fp32; normalization deferred until
    # AFTER the p@V matmul so the rescale touches (TQ, C) instead of (TQ, S).
    s = s - jnp.max(s, axis=-1, keepdims=True)
    p = jnp.exp(s)
    inv_den = pl.reciprocal(jnp.sum(p, axis=-1, keepdims=True), approx=True)  # (TQ, 1)

    # attn[i, c] = sum_j p[i, j] * v[j, c]  -- canonical (TQ,S)@(S,C).
    attn = jnp.dot(p.astype(v_ref.dtype), v_ref[...],
                   preferred_element_type=jnp.float32)                   # (TQ, C)
    attn = (attn * inv_den).astype(wot_ref.dtype)

    # out_proj: canonical (TQ,C)@(C,C) with pre-transposed W_out, then a small
    # (TQ, C) -> (C, TQ) transpose for the channel-major store + residual add.
    out_rm = jnp.dot(attn, wot_ref[...], preferred_element_type=jnp.float32)
    o_ref[...] = (jnp.transpose(out_rm) + bo_ref[...]
                  + x_cm.astype(jnp.float32)).astype(o_ref.dtype)


def vae_attention_block(x_nchw, w_in, b_in, w_out, b_out, *,
                        use_bf16_matmul=False, max_seq_tile=None):
    """x_nchw: (B, C, H, W).  w_in: (3C, C), b_in: (3C,), w_out: (C, C),
    b_out: (C,)  (PyTorch nn.Linear (out_features, in_features) convention)."""
    B, C, H, W = x_nchw.shape
    S = H * W
    out_dtype = x_nchw.dtype
    mxu_dtype = (jnp.bfloat16 if (x_nchw.dtype == jnp.bfloat16 or use_bf16_matmul)
                 else jnp.float32)
    itemsize = jnp.dtype(mxu_dtype).itemsize

    # NCHW -> (B, C, S) is a free reshape.  Pad S up to a lane-dense multiple of
    # 128 (padded keys are masked in-kernel) instead of a full-seq tile fallback.
    s_pad = ((S + 127) // 128) * 128
    x_cs = x_nchw.reshape(B, C, S).astype(mxu_dtype)
    if s_pad != S:
        x_cs = jnp.pad(x_cs, ((0, 0), (0, 0), (0, s_pad - S)))

    # Split the fused in_proj: fold 1/sqrt(C) into W_q/b_q (zero in-kernel cost);
    # stack W_k/W_v into one (2C, C) weight for a single wide MXU pass in kernel 1.
    scale = 1.0 / math.sqrt(C)
    w_q = (w_in[0:C] * scale).astype(mxu_dtype)                  # (C, C)
    b_q = (b_in[0:C] * scale).reshape(C, 1).astype(jnp.float32)
    w_kv = w_in[C:3 * C].astype(mxu_dtype)                       # (2C, C)
    b_kv = b_in[C:3 * C].reshape(2 * C, 1).astype(jnp.float32)
    w_o_t = jnp.transpose(w_out).astype(mxu_dtype)               # (C, C) = W_out^T
    b_o = b_out.reshape(C, 1).astype(jnp.float32)

    # Generation-dependent VMEM limit and tile size.
    vmem_cap = _tpu_vmem_capacity_bytes()
    vmem_limit = max(min(int(vmem_cap * 0.85), 112 * 1024 * 1024), 32 * 1024 * 1024)
    tq = _pick_q_tile(s_pad, C, itemsize, vmem_cap, max_seq_tile)
    n_tiles = s_pad // tq

    compiler_params = pltpu.CompilerParams(
        dimension_semantics=("parallel", "parallel"),  # batch & q-tile axes both
        vmem_limit_bytes=vmem_limit)                   # shardable (v7x megacore)

    x_tile_spec = pl.BlockSpec((None, C, tq), lambda b, i: (b, 0, i))
    kT_tile_spec = pl.BlockSpec((None, C, tq), lambda b, i: (b, 0, i))
    v_tile_spec = pl.BlockSpec((None, tq, C), lambda b, i: (b, i, 0))

    # ---- kernel 1: stacked K^T (channel-major) + V (row-major) projections ----
    k_t, v_r = pl.pallas_call(
        _kv_proj_kernel,
        out_shape=(jax.ShapeDtypeStruct((B, C, s_pad), mxu_dtype),
                   jax.ShapeDtypeStruct((B, s_pad, C), mxu_dtype)),
        grid_spec=pltpu.PrefetchScalarGridSpec(
            num_scalar_prefetch=0,
            grid=(B, n_tiles),
            in_specs=[x_tile_spec,
                      pl.BlockSpec((2 * C, C), lambda b, i: (0, 0)),
                      pl.BlockSpec((2 * C, 1), lambda b, i: (0, 0))],
            out_specs=(kT_tile_spec, v_tile_spec)),
        compiler_params=compiler_params,
    )(x_cs, w_kv, b_kv)

    # ---- kernel 2: fused Q proj + attention + out_proj + residual --------------
    # K/V block index is constant across the q-tile axis -> resident per batch
    # element (no re-DMA across q tiles).
    out_cs = pl.pallas_call(
        functools.partial(_attn_kernel, seq_len=S, seq_pad=s_pad),
        out_shape=jax.ShapeDtypeStruct((B, C, s_pad), out_dtype),
        grid_spec=pltpu.PrefetchScalarGridSpec(
            num_scalar_prefetch=0,
            grid=(B, n_tiles),
            in_specs=[x_tile_spec,                                           # x / residual
                      pl.BlockSpec((None, C, s_pad), lambda b, i: (b, 0, 0)),  # K^T
                      pl.BlockSpec((None, s_pad, C), lambda b, i: (b, 0, 0)),  # V
                      pl.BlockSpec((C, C), lambda b, i: (0, 0)),             # W_q (scaled)
                      pl.BlockSpec((C, C), lambda b, i: (0, 0)),             # W_out^T
                      pl.BlockSpec((C, 1), lambda b, i: (0, 0)),             # b_q (scaled)
                      pl.BlockSpec((C, 1), lambda b, i: (0, 0))],            # b_out
            out_specs=x_tile_spec),
        compiler_params=compiler_params,
    )(x_cs, k_t, v_r, w_q, w_o_t, b_q, b_o)

    if s_pad != S:
        out_cs = out_cs[:, :, :S]
    # (B, C, S) -> NCHW is a free reshape (no transpose / HBM round trip).
    return out_cs.reshape(B, C, H, W)


def _reference(x_nchw, w_in, b_in, w_out, b_out):
    """Pure-JAX reference mirroring the PyTorch forward (n_heads=1, no mask)."""
    B, C, H, W = x_nchw.shape
    S = H * W
    x = jnp.transpose(x_nchw.reshape(B, C, S), (0, 2, 1))           # (B, S, C)
    qkv = jnp.einsum("bsc,oc->bso", x, w_in) + b_in                 # (B, S, 3C)
    q, k, v = jnp.split(qkv, 3, axis=-1)
    scores = jnp.einsum("bqc,bkc->bqk", q, k) / math.sqrt(C)
    p = jax.nn.softmax(scores, axis=-1)
    attn = jnp.einsum("bqk,bkc->bqc", p, v)
    out = jnp.einsum("bsc,oc->bso", attn, w_out) + b_out
    out = out + x
    return jnp.transpose(out, (0, 2, 1)).reshape(B, C, H, W)


if __name__ == "__main__":
    # channels=32 matches the module default; S = 64 exercises the pad-to-128
    # + masked-key path.
    B, C, H, W = 2, 32, 8, 8

    key = jax.random.PRNGKey(0)
    k_x, k_wi, k_bi, k_wo, k_bo = jax.random.split(key, 5)

    x = jax.random.normal(k_x, (B, C, H, W), dtype=jnp.float32)
    # Deterministic synthetic parameters (PyTorch nn.Linear weight shapes).
    w_in = 0.05 * jax.random.normal(k_wi, (3 * C, C), dtype=jnp.float32)
    b_in = 0.05 * jax.random.normal(k_bi, (3 * C,), dtype=jnp.float32)
    w_out = 0.05 * jax.random.normal(k_wo, (C, C), dtype=jnp.float32)
    b_out = 0.05 * jax.random.normal(k_bo, (C,), dtype=jnp.float32)

    y = vae_attention_block(x, w_in, b_in, w_out, b_out)
    y = jax.block_until_ready(y)

    y_ref = _reference(x, w_in, b_in, w_out, b_out)
    assert y.shape == (B, C, H, W)
    # fp32 path everywhere except the EUP approx reciprocal in the softmax
    # denominator; its effect on the output is ~1e-5.
    err = float(jnp.max(jnp.abs(y - y_ref)))
    assert jnp.allclose(y, y_ref, atol=5e-4, rtol=5e-4), f"mismatch vs reference (max abs err {err})"

    print("KERNEL_OK")
</pallas_src>

<mosaic_0001>
module attributes {stable_mosaic.version = 11 : i64} {
  func.func @_kv_proj_kernel(%arg0: i32, %arg1: i32, %arg2: memref<1x32x128xf32, #tpu.memory_space<vmem>>, %arg3: memref<64x32xf32, #tpu.memory_space<vmem>>, %arg4: memref<64x1xf32, #tpu.memory_space<vmem>>, %arg5: memref<1x32x128xf32, #tpu.memory_space<vmem>>, %arg6: memref<1x128x32xf32, #tpu.memory_space<vmem>>) attributes {dimension_semantics = [#tpu.dimension_semantics<parallel>, #tpu.dimension_semantics<parallel>], iteration_bounds = array<i64: 2, 1>, scalar_prefetch = 0 : i64, scratch_operands = 0 : i64, tpu.core_type = #tpu.core_type<tc>, window_params = [{transform_indices = @transform_0, window_bounds = array<i64: 1, 32, 128>}, {pipeline_mode = #tpu.pipeline_mode<synchronous>, transform_indices = @transform_1, window_bounds = array<i64: 64, 32>}, {pipeline_mode = #tpu.pipeline_mode<synchronous>, transform_indices = @transform_2, window_bounds = array<i64: 64, 1>}, {transform_indices = @transform_3, window_bounds = array<i64: 1, 32, 128>}, {transform_indices = @transform_4, window_bounds = array<i64: 1, 128, 32>}]} {
    %c0 = arith.constant 0 : index
    %c0_0 = arith.constant 0 : index
    %0 = vector.load %arg3[%c0, %c0_0] : memref<64x32xf32, #tpu.memory_space<vmem>>, vector<64x32xf32>
    %c0_1 = arith.constant 0 : index
    %c0_2 = arith.constant 0 : index
    %c0_3 = arith.constant 0 : index
    %1 = vector.load %arg2[%c0_1, %c0_2, %c0_3] : memref<1x32x128xf32, #tpu.memory_space<vmem>>, vector<1x32x128xf32>
    %2 = vector.shape_cast %1 : vector<1x32x128xf32> to vector<32x128xf32>
    %cst = arith.constant dense<0.000000e+00> : vector<64x128xf32>
    %3 = tpu.matmul %0, %2, %cst {dimension_numbers = #tpu.dot_dimension_numbers<[1], [0], [0], [1], [0, 0, 1, 1], [], []>} : vector<64x32xf32>, vector<32x128xf32>, vector<64x128xf32> -> vector<64x128xf32>
    %c0_4 = arith.constant 0 : index
    %c0_5 = arith.constant 0 : index
    %4 = vector.load %arg4[%c0_4, %c0_5] : memref<64x1xf32, #tpu.memory_space<vmem>>, vector<64x1xf32>
    %5 = vector.broadcast %4 : vector<64x1xf32> to vector<64x128xf32>
    %6 = arith.addf %3, %5 : vector<64x128xf32>
    %7 = vector.extract_strided_slice %6 {offsets = [0, 0], sizes = [32, 128], strides = [1, 1]} : vector<64x128xf32> to vector<32x128xf32>
    %c0_6 = arith.constant 0 : index
    %c0_7 = arith.constant 0 : index
    %c0_8 = arith.constant 0 : index
    %8 = vector.load %arg5[%c0_6, %c0_7, %c0_8] : memref<1x32x128xf32, #tpu.memory_space<vmem>>, vector<1x32x128xf32>
    %9 = vector.shape_cast %8 : vector<1x32x128xf32> to vector<32x128xf32>
    %10 = vector.shape_cast %7 : vector<32x128xf32> to vector<1x32x128xf32>
    tpu.vector_store %arg5[%c0_6, %c0_7, %c0_8], %10 {strides = array<i32>} : memref<1x32x128xf32, #tpu.memory_space<vmem>>, vector<1x32x128xf32>,
    %11 = vector.extract_strided_slice %6 {offsets = [32, 0], sizes = [32, 128], strides = [1, 1]} : vector<64x128xf32> to vector<32x128xf32>
    %12 = tpu.transpose %11, [1, 0] : vector<32x128xf32> -> vector<128x32xf32>
    %c0_9 = arith.constant 0 : index
    %c0_10 = arith.constant 0 : index
    %c0_11 = arith.constant 0 : index
    %13 = vector.load %arg6[%c0_9, %c0_10, %c0_11] : memref<1x128x32xf32, #tpu.memory_space<vmem>>, vector<1x128x32xf32>
    %14 = vector.shape_cast %13 : vector<1x128x32xf32> to vector<128x32xf32>
    %15 = vector.shape_cast %12 : vector<128x32xf32> to vector<1x128x32xf32>
    tpu.vector_store %arg6[%c0_9, %c0_10, %c0_11], %15 {strides = array<i32>} : memref<1x128x32xf32, #tpu.memory_space<vmem>>, vector<1x128x32xf32>,
    return
  }
  func.func @transform_0(%arg0: i32, %arg1: i32) -> (i32, i32, i32) {
    %c0_i32 = arith.constant 0 : i32
    %c0_i32_0 = arith.constant 0 : i32
    return %arg0, %c0_i32, %arg1 : i32, i32, i32
  }
  func.func @transform_1(%arg0: i32, %arg1: i32) -> (i32, i32) {
    %c0_i32 = arith.constant 0 : i32
    %c0_i32_0 = arith.constant 0 : i32
    %c0_i32_1 = arith.constant 0 : i32
    return %c0_i32, %c0_i32_0 : i32, i32
  }
  func.func @transform_2(%arg0: i32, %arg1: i32) -> (i32, i32) {
    %c0_i32 = arith.constant 0 : i32
    %c0_i32_0 = arith.constant 0 : i32
    %c0_i32_1 = arith.constant 0 : i32
    return %c0_i32, %c0_i32_0 : i32, i32
  }
  func.func @transform_3(%arg0: i32, %arg1: i32) -> (i32, i32, i32) {
    %c0_i32 = arith.constant 0 : i32
    %c0_i32_0 = arith.constant 0 : i32
    return %arg0, %c0_i32, %arg1 : i32, i32, i32
  }
  func.func @transform_4(%arg0: i32, %arg1: i32) -> (i32, i32, i32) {
    %c0_i32 = arith.constant 0 : i32
    %c0_i32_0 = arith.constant 0 : i32
    return %arg0, %arg1, %c0_i32 : i32, i32, i32
  }
}

</mosaic_0001>

<llo_original>
// kernel: tpu_custom_call.1
$region0: #{tpu_custom_call.1}
  #allocation0 [shape = 'u32[]', space=smem, size = 0x4, offset = 0x4, fixed_abs, tag = 'smem constant byte address 0x4 - core index']
  #allocation1 [shape = 'u32[144,128]{1,0:T(1,128)}', space=vmem, size = 0x12000, scoped, tag = 'internal scratch']
  %s0 = inlined_call_operand.vmem [shape: f32[2,32,128], index: 0, kind: input, shape index: {}]
  %s1 = inlined_call_operand.vmem [shape: f32[64,32], index: 1, kind: input, shape index: {}]
  %s2 = inlined_call_operand.vmem [shape: f32[64,1], index: 2, kind: input, shape index: {}]
  %s3 = inlined_call_operand.hbm [shape: f32[2,32,128], index: 3, kind: output, shape index: {0}]
  %s4 = inlined_call_operand.vmem [shape: f32[2,128,32], index: 4, kind: output, shape index: {1}]
  %5 = xla_tuple %s3, %s4
  %s6 = sld [smem:[#allocation0]]
  $region53: #{tpu_custom_call.1} parent=0
    _
  %s8 = ssub.s32 1, %s6
  %s9 = scalar_select 0, %s8, %s6
  $region1: #{tpu_custom_call.1} parent=0
    #allocation2 [shape = 'u8[32768]{0}', space=vmem, size = 0x8000, scoped, tag = 'output window, operand 0']
    #allocation3 [shape = 's32[2]{0}', space=sflag, size = 0x8, scoped, tag = 'scoped memory for tpu_custom_call.1']
    %10 = vsyncpa [#allocation3], 0
    %s11 = scalar_lea.sflag [#allocation3], 1
    %12 = vsyncpa %s11, 0
    loop: start=0, step=1, limit=4
    $region2: #{tpu_custom_call.1} parent=1 // loop_pre_header
      _
    $region3: #{tpu_custom_call.1} parent=1 // loop_header
      %s14 = sphi 0, %s18
      %p15 = scmp.ge.s32.totalorder %s14, 4
      %s21 = sphi 0, %s33
      %s22 = sphi 0, %s29
      %s23 = sphi 0, %s21
      %s24 = sphi 0, %s22
      %s25 = sphi 0, %s23
      %s26 = sphi 0, %s24
      %s38 = sphi 0, %s40
      %s41 = sphi 0, %s38
      %s42 = sphi 0, %s41
      %s58 = sphi 0, %s42
      %s62 = sphi 0, %s62
      %s64 = sphi 0, %s62
      %s65 = sphi 0, %s64
      %s79 = sphi 0, %s65
      %s83 = sphi 0, %s83
      %s85 = sphi 0, %s83
      %s86 = sphi 0, %s85
      %s100 = sphi 0, %s86
      %s108 = sphi 0, %s110
      %s111 = sphi 0, %s108
      %s112 = sphi 0, %s111
      %s128 = sphi 0, %s112
      %s136 = sphi 0, %s138
      %s139 = sphi 0, %s136
      %s140 = sphi 0, %s139
      %s156 = sphi 0, %s140
    $region4: #{tpu_custom_call.1} parent=1 // loop_header_branch
      %17 = sbr.rel (%p15) target = $region8
    $region5: #{tpu_custom_call.1} parent=1 // loop_body
      %s19 = ssub.s32 %s14, 1
      %s20 = ssub.s32 %s14, 2
      %s27 = sadd.s32 1, %s22
      %p28 = scmp.ge.s32.totalorder %s27, 1
      %s29 = scalar_select %p28, 0, %s27
      %s30 = sadd.s32 1, %s21
      %s31 = scalar_select %p28, %s30, %s21
      %p32 = scmp.ge.s32.totalorder %s31, 2
      %s33 = scalar_select %p32, 0, %s31
      %s34 = ssub.s32 %s21, %s33
      %s35 = ssub.s32 %s22, %s29
      %s36 = sor.u32 %s34, %s35
      %p37 = scmp.eq.s32.totalorder %s36, 0
      %s39 = sadd.s32 %s38, 1
      %s40 = scalar_select %p37, %s38, %s39
      %p43 = pneg %p37
      %p44 = scmp.eq.s32.totalorder %s14, 1
      %p45 = por %p43, %p44
      %p46 = scmp.ne.s32.totalorder %s38, %s41
      %p47 = scmp.eq.s32.totalorder %s14, 0
      %p48 = por %p46, %p47
      %p49 = scmp.ne.s32.totalorder %s38, %s41
      %p50 = scmp.eq.s32.totalorder %s19, 1
      %p51 = por %p49, %p50
      %p52 = scmp.ne.s32.totalorder %s41, %s42
      %p53 = scmp.eq.s32.totalorder %s19, 0
      %p54 = por %p52, %p53
      %p55 = scmp.ne.s32.totalorder %s41, %s42
      %p56 = scmp.eq.s32.totalorder %s20, 1
      %p57 = por %p55, %p56
      %p59 = scmp.ne.s32.totalorder %s42, %s58
      %p60 = scmp.eq.s32.totalorder %s20, 0
      %p61 = por %p59, %p60
      %s63 = sadd.s32 %s62, 1
      %p66 = scmp.eq.s32.totalorder %s14, 1
      %p67 = scmp.ne.s32.totalorder %s62, %s64
      %p68 = scmp.eq.s32.totalorder %s14, 0
      %p69 = por %p67, %p68
      %p70 = scmp.ne.s32.totalorder %s62, %s64
      %p71 = scmp.eq.s32.totalorder %s19, 1
      %p72 = por %p70, %p71
      %p73 = scmp.ne.s32.totalorder %s64, %s65
      %p74 = scmp.eq.s32.totalorder %s19, 0
      %p75 = por %p73, %p74
      %p76 = scmp.ne.s32.totalorder %s64, %s65
      %p77 = scmp.eq.s32.totalorder %s20, 1
      %p78 = por %p76, %p77
      %p80 = scmp.ne.s32.totalorder %s65, %s79
      %p81 = scmp.eq.s32.totalorder %s20, 0
      %p82 = por %p80, %p81
      %s84 = sadd.s32 %s83, 1
      %p87 = scmp.eq.s32.totalorder %s14, 1
      %p88 = scmp.ne.s32.totalorder %s83, %s85
      %p89 = scmp.eq.s32.totalorder %s14, 0
      %p90 = por %p88, %p89
      %p91 = scmp.ne.s32.totalorder %s83, %s85
      %p92 = scmp.eq.s32.totalorder %s19, 1
      %p93 = por %p91, %p92
      %p94 = scmp.ne.s32.totalorder %s85, %s86
      %p95 = scmp.eq.s32.totalorder %s19, 0
      %p96 = por %p94, %p95
      %p97 = scmp.ne.s32.totalorder %s85, %s86
      %p98 = scmp.eq.s32.totalorder %s20, 1
      %p99 = por %p97, %p98
      %p101 = scmp.ne.s32.totalorder %s86, %s100
      %p102 = scmp.eq.s32.totalorder %s20, 0
      %p103 = por %p101, %p102
      %s104 = ssub.s32 %s21, %s33
      %s105 = ssub.s32 %s22, %s29
      %s106 = sor.u32 %s104, %s105
      %p107 = scmp.eq.s32.totalorder %s106, 0
      %s109 = sadd.s32 %s108, 1
      %s110 = scalar_select %p107, %s108, %s109
      %p113 = pneg %p107
      %p114 = scmp.eq.s32.totalorder %s14, 1
      %p115 = por %p113, %p114
      %p116 = scmp.ne.s32.totalorder %s108, %s111
      %p117 = scmp.eq.s32.totalorder %s14, 0
      %p118 = por %p116, %p117
      %p119 = scmp.ne.s32.totalorder %s108, %s111
      %p120 = scmp.eq.s32.totalorder %s19, 1
      %p121 = por %p119, %p120
      %p122 = scmp.ne.s32.totalorder %s111, %s112
      %p123 = scmp.eq.s32.totalorder %s19, 0
      %p124 = por %p122, %p123
      %p125 = scmp.ne.s32.totalorder %s111, %s112
      %p126 = scmp.eq.s32.totalorder %s20, 1
      %p127 = por %p125, %p126
      %p129 = scmp.ne.s32.totalorder %s112, %s128
      %p130 = scmp.eq.s32.totalorder %s20, 0
      %p131 = por %p129, %p130
      %s132 = ssub.s32 %s21, %s33
      %s133 = ssub.s32 %s22, %s29
      %s134 = sor.u32 %s132, %s133
      %p135 = scmp.eq.s32.totalorder %s134, 0
      %s137 = sadd.s32 %s136, 1
      %s138 = scalar_select %p135, %s136, %s137
      %p141 = pneg %p135
      %p142 = scmp.eq.s32.totalorder %s14, 1
      %p143 = por %p141, %p142
      %p144 = scmp.ne.s32.totalorder %s136, %s139
      %p145 = scmp.eq.s32.totalorder %s14, 0
      %p146 = por %p144, %p145
      %p147 = scmp.ne.s32.totalorder %s136, %s139
      %p148 = scmp.eq.s32.totalorder %s19, 1
      %p149 = por %p147, %p148
      %p150 = scmp.ne.s32.totalorder %s139, %s140
      %p151 = scmp.eq.s32.totalorder %s19, 0
      %p152 = por %p150, %p151
      %p153 = scmp.ne.s32.totalorder %s139, %s140
      %p154 = scmp.eq.s32.totalorder %s20, 1
      %p155 = por %p153, %p154
      %p157 = scmp.ne.s32.totalorder %s140, %s156
      %p158 = scmp.eq.s32.totalorder %s20, 0
      %p159 = por %p157, %p158
      %p160 = scmp.le.s32.totalorder 1, %s14
      %p161 = scmp.lt.s32.totalorder %s14, 3
      %p162 = pnand %p160, %p161
      %p163 = pneg %p162
      // Predicated region
      $region9: #{tpu_custom_call.1} parent=5 // pred_check
        _
      $region10: #{tpu_custom_call.1} parent=5 // pred_check_branch
        %165 = sbr.rel (%p162) target = $region12
      $region11: #{tpu_custom_call.1} parent=5 // pred_region
        %s166 = ssub.s32 %s14, 1
        // Predicated region
        $region13: #{tpu_custom_call.1} parent=11 // pred_check
          %p167 = pneg %p75
        $region14: #{tpu_custom_call.1} parent=11 // pred_check_branch
          %169 = sbr.rel (%p167) target = $region16
        $region15: #{tpu_custom_call.1} parent=11 // pred_region
          _
        $region16: #{tpu_custom_call.1} parent=11 // pred_fallthru
          _
        // Predicated region
        $region17: #{tpu_custom_call.1} parent=11 // pred_check
          %p170 = pneg %p96
        $region18: #{tpu_custom_call.1} parent=11 // pred_check_branch
          %172 = sbr.rel (%p170) target = $region20
        $region19: #{tpu_custom_call.1} parent=11 // pred_region
          _
        $region20: #{tpu_custom_call.1} parent=11 // pred_fallthru
          _
      $region12: #{tpu_custom_call.1} parent=5 // pred_fallthru
        _
      %p173 = scmp.lt.s32.totalorder %s14, 2
      // Predicated region
      $region21: #{tpu_custom_call.1} parent=5 // pred_check
        %p174 = pneg %p173
      $region22: #{tpu_custom_call.1} parent=5 // pred_check_branch
        %176 = sbr.rel (%p174) target = $region24
      $region23: #{tpu_custom_call.1} parent=5 // pred_region
        // Predicated region
        $region25: #{tpu_custom_call.1} parent=23 // pred_check
          %p177 = pneg %p48
        $region26: #{tpu_custom_call.1} parent=23 // pred_check_branch
          %179 = sbr.rel (%p177) target = $region28
        $region27: #{tpu_custom_call.1} parent=23 // pred_region
          %p180 = scmp.lt.s32.totalorder %s21, 1
          %s181 = scalar_select %p180, %s21, 1
          %p182 = scmp.lt.s32.totalorder %s22, 0
          %s183 = scalar_select %p182, %s22, 0
          %s184 = smul.addr %s181, 4
          %s185 = sadd.s32 %s183, %s184
          %s186 = smul.addr %s185, 8
          %s187 = scalar_lea.vmem %s0, %s186
        $region28: #{tpu_custom_call.1} parent=23 // pred_fallthru
          _
      $region24: #{tpu_custom_call.1} parent=5 // pred_fallthru
        _
      %p188 = scmp.le.s32.totalorder 1, %s14
      %p189 = scmp.lt.s32.totalorder %s14, 3
      %p190 = pnand %p188, %p189
      %p191 = pneg %p190
      // Predicated region
      $region29: #{tpu_custom_call.1} parent=5 // pred_check
        _
      $region30: #{tpu_custom_call.1} parent=5 // pred_check_branch
        %193 = sbr.rel (%p190) target = $region32
      $region31: #{tpu_custom_call.1} parent=5 // pred_region
        %s194 = ssub.s32 %s14, 1
        %p195 = scmp.lt.s32.totalorder %s23, 1
        %s196 = scalar_select %p195, %s23, 1
        %p197 = scmp.lt.s32.totalorder %s24, 0
        %s198 = scalar_select %p197, %s24, 0
        %s199 = smul.addr %s196, 4
        %s200 = sadd.s32 %s198, %s199
        %s201 = smul.addr %s200, 8
        %s202 = scalar_lea.vmem %s0, %s201
        %p203 = pneg %p54
        %p204 = pneg %p51
        %p205 = pneg %p75
        %p206 = pneg %p72
        %p207 = pneg %p96
        %p208 = pneg %p93
        %p209 = pneg %p124
        %p210 = pneg %p121
        %s211 = sand.u32 %s111, 1
        %s212 = scalar_lea.sflag [#allocation3], %s211
        %s213 = sand.u32 %s111, 1
        %s214 = smul.addr %s213, 32
        %s215 = scalar_lea.vmem [#allocation2], %s214
        %p216 = pneg %p152
        %p217 = pneg %p149
        %s218 = smul.u32 16, %s24
        %p219 = scmp.lt.s32.totalorder %s23, 1
        %s220 = scalar_select %p219, %s23, 1
        %p221 = scmp.lt.s32.totalorder %s218, 15
        %s222 = scalar_select %p221, %s218, 15
        %s223 = smul.addr %s220, 16
        %s224 = sadd.s32 %s222, %s223
        %s225 = smul.addr %s224, 8
        %s226 = scalar_lea.vmem %s4, %s225
        %p227 = scmp.lt.s32.totalorder %s23, 1
        %s228 = scalar_select %p227, %s23, 1
        %p229 = scmp.lt.s32.totalorder %s24, 0
        %s230 = scalar_select %p229, %s24, 0
        %s231 = smul.addr %s228, 4
        %s232 = sadd.s32 %s230, %s231
        %s233 = smul.addr %s232, 8
        %s234 = scalar_lea.vmem %s0, %s233
        %s235 = smul.u32 16, %s24
        %p236 = scmp.lt.s32.totalorder %s23, 1
        %s237 = scalar_select %p236, %s23, 1
        %p238 = scmp.lt.s32.totalorder %s235, 15
        %s239 = scalar_select %p238, %s235, 15
        %s240 = smul.addr %s237, 16
        %s241 = sadd.s32 %s239, %s240
        %s242 = smul.addr %s241, 8
        %s243 = scalar_lea.vmem %s4, %s242
        %s244 = smul.u32 16, %s24
        %v245 = vld [vmem:[%s1] sm:$0xff]
        %v246 = vld [vmem:[%s1 + $0x8] sm:$0xff]
        %v247 = vld [vmem:[%s1 + $0x10] sm:$0xff]
        %v248 = vld [vmem:[%s1 + $0x18] sm:$0xff]
        %v249 = vld [vmem:[%s1 + $0x20] sm:$0xff]
        %v250 = vld [vmem:[%s1 + $0x28] sm:$0xff]
        %v251 = vld [vmem:[%s1 + $0x30] sm:$0xff]
        %v252 = vld [vmem:[%s1 + $0x38] sm:$0xff]
        %v253 = vld [vmem:[%s234] sm:$0xff]
        %v254 = vld [vmem:[%s234 + $0x8] sm:$0xff]
        %v255 = vld [vmem:[%s234 + $0x10] sm:$0xff]
        %v256 = vld [vmem:[%s234 + $0x18] sm:$0xff]
        %v257 = vld [vmem:[%s2] sm:$0xff]
        %v258 = vld [vmem:[%s2 + $0x8] sm:$0xff]
        %v259 = vld [vmem:[%s2 + $0x10] sm:$0xff]
        %v260 = vld [vmem:[%s2 + $0x18] sm:$0xff]
        %v261 = vld [vmem:[%s2 + $0x20] sm:$0xff]
        %v262 = vld [vmem:[%s2 + $0x28] sm:$0xff]
        %v263 = vld [vmem:[%s2 + $0x30] sm:$0xff]
        %v264 = vld [vmem:[%s2 + $0x38] sm:$0xff]
        %266 = vset.pattern.permute.xlu0 0
        %267 = vperm.xlu0 %266, %v257
        %v268 = vpop.permute.xlu0 %267
        %271 = vset.pattern.permute.xlu0 0
        %272 = vperm.xlu0 %271, %v258
        %v273 = vpop.permute.xlu0 %272
        %276 = vset.pattern.permute.xlu0 0
        %277 = vperm.xlu0 %276, %v259
        %v278 = vpop.permute.xlu0 %277
        %281 = vset.pattern.permute.xlu0 0
        %282 = vperm.xlu0 %281, %v260
        %v283 = vpop.permute.xlu0 %282
        %286 = vset.pattern.permute.xlu0 0
        %287 = vperm.xlu0 %286, %v261
        %v288 = vpop.permute.xlu0 %287
        %291 = vset.pattern.permute.xlu0 0
        %292 = vperm.xlu0 %291, %v262
        %v293 = vpop.permute.xlu0 %292
        %296 = vset.pattern.permute.xlu0 0
        %297 = vperm.xlu0 %296, %v263
        %v298 = vpop.permute.xlu0 %297
        %301 = vset.pattern.permute.xlu0 0
        %302 = vperm.xlu0 %301, %v264
        %v303 = vpop.permute.xlu0 %302
        %vm305 = vcmask 261120
        %v307 = vsel %vm305, %v245, 0
        %v310 = vsel %vm305, %v246, 0
        %v313 = vsel %vm305, %v247, 0
        %v316 = vsel %vm305, %v248, 0
        %v319 = vsel %vm305, %v249, 0
        %v322 = vsel %vm305, %v250, 0
        %v325 = vsel %vm305, %v251, 0
        %v328 = vsel %vm305, %v252, 0
        %330 = vmatprep.subr.mxu0 0.0
        %331 = vmatpush1.msra.mxu0 %v253
        %332 = vmatprep.subr.mxu0 0.0
        %333 = vmatpush1.msra.mxu0 %v254
        %334 = vmatprep.subr.mxu0 0.0
        %335 = vmatpush1.msra.mxu0 %v255
        %336 = vmatprep.subr.mxu0 0.0
        %337 = vmatpush1.msra.mxu0 %v256
        %338 = vmatprep.subr.mxu0 0.0
        %339 = vmatpush1.msra.mxu0 0.0
        %340 = vmatprep.subr.mxu0 0.0
        %341 = vmatpush1.msra.mxu0 0.0
        %342 = vmatprep.subr.mxu0 0.0
        %343 = vmatpush1.msra.mxu0 0.0
        %344 = vmatprep.subr.mxu0 0.0
        %345 = vmatpush1.msra.mxu0 0.0
        %346 = vmatprep.subr.mxu0 0.0
        %347 = vmatpush1.msra.mxu0 0.0
        %348 = vmatprep.subr.mxu0 0.0
        %349 = vmatpush1.msra.mxu0 0.0
        %350 = vmatprep.subr.mxu0 0.0
        %351 = vmatpush1.msra.mxu0 0.0
        %352 = vmatprep.subr.mxu0 0.0
        %353 = vmatpush1.msra.mxu0 0.0
        %354 = vmatprep.subr.mxu0 0.0
        %355 = vmatpush1.msra.mxu0 0.0
        %356 = vmatprep.subr.mxu0 0.0
        %357 = vmatpush1.msra.mxu0 0.0
        %358 = vmatprep.subr.mxu0 0.0
        %359 = vmatpush1.msra.mxu0 0.0
        %360 = vmatprep.subr.mxu0 0.0
        %361 = vmatpush1.msra.mxu0 0.0
        %362 = vmatprep.subr.mxu0 0.0
        %363 = vmatpush1.msra.mxu0 0.0
        %364 = vmatprep.subr.mxu0 0.0
        %365 = vmatpush1.msra.mxu0 0.0
        %366 = vmatprep.subr.mxu0 0.0
        %367 = vmatpush1.msra.mxu0 0.0
        %368 = vmatprep.subr.mxu0 0.0
        %369 = vmatpush1.msra.mxu0 0.0
        %370 = vmatprep.subr.mxu0 0.0
        %371 = vmatpush1.msra.mxu0 0.0
        %372 = vmatprep.subr.mxu0 0.0
        %373 = vmatpush1.msra.mxu0 0.0
        %374 = vmatprep.subr.mxu0 0.0
        %375 = vmatpush1.msra.mxu0 0.0
        %376 = vmatprep.subr.mxu0 0.0
        %377 = vmatpush1.msra.mxu0 0.0
        %378 = vmatprep.subr.mxu0 0.0
        %379 = vmatpush1.msra.mxu0 0.0
        %380 = vmatprep.subr.mxu0 0.0
        %381 = vmatpush1.msra.mxu0 0.0
        %382 = vmatprep.subr.mxu0 0.0
        %383 = vmatpush1.msra.mxu0 0.0
        %384 = vmatprep.subr.mxu0 0.0
        %385 = vmatpush1.msra.mxu0 0.0
        %386 = vmatprep.subr.mxu0 0.0
        %387 = vmatpush1.msra.mxu0 0.0
        %388 = vmatprep.subr.mxu0 0.0
        %389 = vmatpush1.msra.mxu0 0.0
        %390 = vmatprep.subr.mxu0 0.0
        %391 = vmatpush1.msra.mxu0 0.0
        %392 = vmatprep.subr.mxu0 0.0
        %393 = vmatpush1.msra.mxu0 0.0
        %394 = vmatprep.mubr.f32.mxu0 0.0
        %395 = vmatmul.mubr.f32.gmra.mrb[0].mxu0 %v307
        %v396 = vpop.f32.mrb[0].mxu0
        %v397 = vadd.f32 %v268, %v396
        %v398 = vpop.f32.mrb[0].mxu0
        %399 = vmatprep.mubr.f32.mxu0 0.0
        %400 = vmatmul.mubr.f32.gmra.mrb[0].mxu0 %v310
        %v401 = vpop.f32.mrb[0].mxu0
        %v402 = vadd.f32 %v273, %v401
        %v403 = vpop.f32.mrb[0].mxu0
        %404 = vmatprep.mubr.f32.mxu0 0.0
        %405 = vmatmul.mubr.f32.gmra.mrb[0].mxu0 %v313
        %v406 = vpop.f32.mrb[0].mxu0
        %v407 = vadd.f32 %v278, %v406
        %v408 = vpop.f32.mrb[0].mxu0
        %409 = vmatprep.mubr.f32.mxu0 0.0
        %410 = vmatmul.mubr.f32.gmra.mrb[0].mxu0 %v316
        %v411 = vpop.f32.mrb[0].mxu0
        %v412 = vadd.f32 %v283, %v411
        %v413 = vpop.f32.mrb[0].mxu0
        %414 = vmatprep.mubr.f32.mxu0 0.0
        %415 = vmatmul.mubr.f32.gmra.mrb[0].mxu0 %v319
        %v416 = vpop.f32.mrb[0].mxu0
        %v417 = vadd.f32 %v288, %v416
        %v418 = vpop.f32.mrb[0].mxu0
        %419 = vmatprep.mubr.f32.mxu0 0.0
        %420 = vmatmul.mubr.f32.gmra.mrb[0].mxu0 %v322
        %v421 = vpop.f32.mrb[0].mxu0
        %v422 = vadd.f32 %v293, %v421
        %v423 = vpop.f32.mrb[0].mxu0
        %424 = vmatprep.mubr.f32.mxu0 0.0
        %425 = vmatmul.mubr.f32.gmra.mrb[0].mxu0 %v325
        %v426 = vpop.f32.mrb[0].mxu0
        %v427 = vadd.f32 %v298, %v426
        %v428 = vpop.f32.mrb[0].mxu0
        %429 = vmatprep.mubr.f32.mxu0 0.0
        %430 = vmatmul.mubr.f32.gmra.mrb[0].mxu0 %v328
        %v431 = vpop.f32.mrb[0].mxu0
        %v432 = vadd.f32 %v303, %v431
        %v433 = vpop.f32.mrb[0].mxu0
        %434 = vdwg.mxu0
        %435 = vst [vmem:[%s215] sm:$0xff] %v397
        %436 = vst [vmem:[%s215 + $0x8] sm:$0xff] %v402
        %437 = vst [vmem:[%s215 + $0x10] sm:$0xff] %v407
        %438 = vst [vmem:[%s215 + $0x18] sm:$0xff] %v412
        %439 = vxpose.xlu0.b32.start [1/16] %v417, 128
        %440 = vxpose.xlu0.b32.cont [2/16] %v422, 128
        %441 = vxpose.xlu0.b32.cont [3/16] %v427, 128
        %442 = vxpose.xlu0.b32.cont [4/16] %v432, 128
        %443 = vxpose.xlu0.b32.cont [5/16] 0.0, 128
        %444 = vxpose.xlu0.b32.cont [6/16] 0.0, 128
        %445 = vxpose.xlu0.b32.cont [7/16] 0.0, 128
        %446 = vxpose.xlu0.b32.cont [8/16] 0.0, 128
        %447 = vxpose.xlu0.b32.cont [9/16] 0.0, 128
        %448 = vxpose.xlu0.b32.cont [10/16] 0.0, 128
        %449 = vxpose.xlu0.b32.cont [11/16] 0.0, 128
        %450 = vxpose.xlu0.b32.cont [12/16] 0.0, 128
        %451 = vxpose.xlu0.b32.cont [13/16] 0.0, 128
        %452 = vxpose.xlu0.b32.cont [14/16] 0.0, 128
        %453 = vxpose.xlu0.b32.cont [15/16] 0.0, 128
        %454 = vxpose.xlu0.b32.end [16/16] 0.0, 128
        %v455 = vpop.trf.xlu0
        %v456 = vpop.trf.xlu0
        %v457 = vpop.trf.xlu0
        %v458 = vpop.trf.xlu0
        %v459 = vpop.trf.xlu0
        %v460 = vpop.trf.xlu0
        %v461 = vpop.trf.xlu0
        %v462 = vpop.trf.xlu0
        %v463 = vpop.trf.xlu0
        %v464 = vpop.trf.xlu0
        %v465 = vpop.trf.xlu0
        %v466 = vpop.trf.xlu0
        %v467 = vpop.trf.xlu0
        %v468 = vpop.trf.xlu0
        %v469 = vpop.trf.xlu0
        %v470 = vpop.trf.xlu0
        %471 = vst.msk [vmem:[%s243] sm:$0xff] %vm305, %v455
        %472 = vst.msk [vmem:[%s243 + $0x8] sm:$0xff] %vm305, %v456
        %473 = vst.msk [vmem:[%s243 + $0x10] sm:$0xff] %vm305, %v457
        %474 = vst.msk [vmem:[%s243 + $0x18] sm:$0xff] %vm305, %v458
        %475 = vst.msk [vmem:[%s243 + $0x20] sm:$0xff] %vm305, %v459
        %476 = vst.msk [vmem:[%s243 + $0x28] sm:$0xff] %vm305, %v460
        %477 = vst.msk [vmem:[%s243 + $0x30] sm:$0xff] %vm305, %v461
        %478 = vst.msk [vmem:[%s243 + $0x38] sm:$0xff] %vm305, %v462
        %479 = vst.msk [vmem:[%s243 + $0x40] sm:$0xff] %vm305, %v463
        %480 = vst.msk [vmem:[%s243 + $0x48] sm:$0xff] %vm305, %v464
        %481 = vst.msk [vmem:[%s243 + $0x50] sm:$0xff] %vm305, %v465
        %482 = vst.msk [vmem:[%s243 + $0x58] sm:$0xff] %vm305, %v466
        %483 = vst.msk [vmem:[%s243 + $0x60] sm:$0xff] %vm305, %v467
        %484 = vst.msk [vmem:[%s243 + $0x68] sm:$0xff] %vm305, %v468
        %485 = vst.msk [vmem:[%s243 + $0x70] sm:$0xff] %vm305, %v469
        %486 = vst.msk [vmem:[%s243 + $0x78] sm:$0xff] %vm305, %v470
        %s487 = sand.u32 %s111, 1
        %s488 = scalar_lea.sflag [#allocation3], %s487
        %s489 = sand.u32 %s111, 1
        %s490 = smul.addr %s489, 32
        %s491 = scalar_lea.vmem [#allocation2], %s490
        %s492 = smul.u32 16, %s24
        %p493 = scmp.lt.s32.totalorder %s23, 1
        %s494 = scalar_select %p493, %s23, 1
        %p495 = scmp.lt.s32.totalorder %s492, 15
        %s496 = scalar_select %p495, %s492, 15
        %s497 = smul.addr %s494, 16
        %s498 = sadd.s32 %s496, %s497
        %s499 = smul.addr %s498, 8
        %s500 = scalar_lea.vmem %s4, %s499
        // Predicated region
        $region33: #{tpu_custom_call.1} parent=31 // pred_check
          %p501 = pneg %p121
        $region34: #{tpu_custom_call.1} parent=31 // pred_check_branch
          %503 = sbr.rel (%p501) target = $region36
        $region35: #{tpu_custom_call.1} parent=31 // pred_region
          %s505 = ssub.s32 512, 512
          %506 = vsyncadd %s488, %s505
          %s507 = smul.addr %s23, 4
          %s508 = sadd.s32 %s24, %s507
          %s509 = smul.addr %s508, 128
          %s510 = scalar_lea.hbm %s3, %s509
          %s511 = sshll.u32 %s491, 4
          %s512 = int_to_ptr.vmem [resolvable:$true] %s511
          %517 = dma.vmem_to_hbm [thread:$0]  %s512, 512, %s510, %s488, 128, 128, 8
        $region36: #{tpu_custom_call.1} parent=31 // pred_fallthru
          _
        // Predicated region
        $region37: #{tpu_custom_call.1} parent=31 // pred_check
          %p518 = pneg %p149
        $region38: #{tpu_custom_call.1} parent=31 // pred_check_branch
          %520 = sbr.rel (%p518) target = $region40
        $region39: #{tpu_custom_call.1} parent=31 // pred_region
          %s521 = smul.u32 16, %s24
        $region40: #{tpu_custom_call.1} parent=31 // pred_fallthru
          _
      $region32: #{tpu_custom_call.1} parent=5 // pred_fallthru
        _
      %p522 = scmp.le.s32.totalorder 2, %s14
      // Predicated region
      $region41: #{tpu_custom_call.1} parent=5 // pred_check
        %p523 = pneg %p522
      $region42: #{tpu_custom_call.1} parent=5 // pred_check_branch
        %525 = sbr.rel (%p523) target = $region44
      $region43: #{tpu_custom_call.1} parent=5 // pred_region
        %s526 = ssub.s32 %s14, 2
        // Predicated region
        $region45: #{tpu_custom_call.1} parent=43 // pred_check
          %p527 = pneg %p127
        $region46: #{tpu_custom_call.1} parent=43 // pred_check_branch
          %529 = sbr.rel (%p527) target = $region48
        $region47: #{tpu_custom_call.1} parent=43 // pred_region
          %s530 = sand.u32 %s112, 1
          %s531 = scalar_lea.sflag [#allocation3], %s530
          %s532 = sand.u32 %s112, 1
          %s533 = smul.addr %s532, 32
          %s534 = scalar_lea.vmem [#allocation2], %s533
          %535 = dma.done %s531, 512
        $region48: #{tpu_custom_call.1} parent=43 // pred_fallthru
          _
        // Predicated region
        $region49: #{tpu_custom_call.1} parent=43 // pred_check
          %p536 = pneg %p155
        $region50: #{tpu_custom_call.1} parent=43 // pred_check_branch
          %538 = sbr.rel (%p536) target = $region52
        $region51: #{tpu_custom_call.1} parent=43 // pred_region
          %s539 = smul.u32 16, %s26
          %p540 = scmp.lt.s32.totalorder %s25, 1
          %s541 = scalar_select %p540, %s25, 1
          %p542 = scmp.lt.s32.totalorder %s539, 15
          %s543 = scalar_select %p542, %s539, 15
          %s544 = smul.addr %s541, 16
          %s545 = sadd.s32 %s543, %s544
          %s546 = smul.addr %s545, 8
          %s547 = scalar_lea.vmem %s4, %s546
        $region52: #{tpu_custom_call.1} parent=43 // pred_fallthru
          _
      $region44: #{tpu_custom_call.1} parent=5 // pred_fallthru
        _
    $region6: #{tpu_custom_call.1} parent=1 // loop_footer
      %s18 = sadd.s32 1, %s14
    $region7: #{tpu_custom_call.1} parent=1 // loop_footer_branch
      %13 = sbr.rel target = $region3
    $region8: #{tpu_custom_call.1} parent=1 // loop_exit
      _
    %548 = vsyncpa [#allocation3], 1
    %s549 = scalar_lea.sflag [#allocation3], 1
    %550 = vsyncpa %s549, 1

</llo_original>
